<compile_context>
chip_gen: v7x
topology: tpu7x:2x2x1
jax: 0.10.0
libtpu: 0.0.40
codegen_flags: <defaults>
</compile_context>

<pallas_src>
import functools
import math

import jax
import jax.numpy as jnp
from jax.experimental import pallas as pl
from jax.experimental.pallas import tpu as pltpu


def mlp_kernel(x_ref, w1_ref, b1_ref, w2_ref, b2_ref, o_ref):
    # x_ref : (TMG, g*C_in)     grouped pixels, lane-dense, compute dtype
    # w1_ref: (g*C_in, g*C_hid) block-diagonal kron(I_g, W1), compute dtype
    # b1_ref: (1, g*C_hid)      f32 bias tiled g times
    # w2_ref: (g*C_hid, g*C_out)
    # b2_ref: (1, g*C_out)
    # o_ref : (TMG, g*C_out)    lane-dense output
    h = jnp.dot(x_ref[...], w1_ref[...], preferred_element_type=jnp.float32)
    h = jnp.tanh(h + b1_ref[...])                      # bias + tanh kept in f32
    y = jnp.dot(h.astype(w2_ref.dtype), w2_ref[...],
                preferred_element_type=jnp.float32)
    o_ref[...] = (y + b2_ref[...]).astype(o_ref.dtype)


def _lcm(a, b):
    return a * b // math.gcd(a, b)


def _round_up(x, m):
    return ((x + m - 1) // m) * m


def _mxu_lane_target():
    """256-lane pixel groups on 256-wide-MXU chips (v6e/v7x), 128 otherwise."""
    try:
        kind = jax.devices()[0].device_kind.lower()
    except Exception:
        return 128
    return 256 if ("v6" in kind or "v7" in kind) else 128


def mlp_forward(x, w1, b1, w2, b2, *, tile_pixels=131072,
                compute_dtype=jnp.bfloat16, out_dtype=None, min_grid_steps=8):
    """x: (B, H, W, C_in) -> (B, H, W, C_out). w1:(C_in,C_hid), w2:(C_hid,C_out).

    compute_dtype: dtype the streamed operands (x, kron-weights) are cast to.
      bf16 halves HBM traffic for this memory-bound kernel; pass jnp.float32
      for bit-strict parity with an f32 reference.
    out_dtype: output dtype (defaults to x.dtype).
    """
    B, H, W, C_in = x.shape
    C_hid = w1.shape[1]
    C_out = w2.shape[1]
    out_dtype = x.dtype if out_dtype is None else out_dtype
    M = B * H * W

    # Pixel-group factor: smallest g with g*C_in and g*C_out multiples of the
    # MXU lane target (256 on v6e/v7x, 128 on older chips).
    lane_target = _mxu_lane_target()
    g = _lcm(lane_target // math.gcd(lane_target, C_in),
             lane_target // math.gcd(lane_target, C_out))

    # Pad pixel count to a multiple of g.  For typical shapes B*H*W is already
    # a multiple of g and this HBM copy path is skipped entirely.
    Mp = pl.cdiv(M, g) * g
    x2d = x.reshape(M, C_in)
    if Mp != M:
        # TODO(synk): handle the ragged tail with an in-kernel mask / second
        # small call instead of materializing padded HBM copies.
        x2d = jnp.pad(x2d, ((0, Mp - M), (0, 0)))

    # Grouped lane-dense view: contiguous row-major relabeling, no data move.
    # Single compute dtype for both dot operands (no silent f32 promotion).
    Mg = Mp // g
    xg = x2d.reshape(Mg, g * C_in).astype(compute_dtype)

    # Block-diagonal weight expansions + tiled biases (tiny: <=256 KiB total).
    eye = jnp.eye(g, dtype=jnp.float32)
    w1g = jnp.kron(eye, w1.astype(jnp.float32)).astype(compute_dtype)
    w2g = jnp.kron(eye, w2.astype(jnp.float32)).astype(compute_dtype)
    b1g = jnp.tile(b1.reshape(1, C_hid).astype(jnp.float32), (1, g))
    b2g = jnp.tile(b2.reshape(1, C_out).astype(jnp.float32), (1, g))

    # Row tile in grouped rows (tile_pixels pixels per grid step).  Big tiles
    # amortize the ~0.35us/step overhead, but cap so the grid keeps at least
    # ~min_grid_steps steps (megacore sharding + full DMA pipeline on v7x).
    # bf16 packs sublanes in pairs -> keep tmg a multiple of 16 there.
    sub = 16 if jnp.dtype(compute_dtype).itemsize == 2 else 8
    tmg = max(sub, tile_pixels // g)
    tmg = min(tmg, _round_up(pl.cdiv(Mg, min_grid_steps), sub))
    if tmg >= Mg:
        tmg = Mg                            # single block: full dim is legal
    else:
        tmg = max(sub, (tmg // sub) * sub)

    grid = (pl.cdiv(Mg, tmg),)

    # Scoped-VMEM budget from the real footprint: double-buffered in/out blocks
    # + the in-kernel hidden/output intermediates + (double-buffered) weights.
    cbytes = jnp.dtype(compute_dtype).itemsize
    obytes = jnp.dtype(out_dtype).itemsize
    blk_in = tmg * g * C_in * cbytes
    blk_out = tmg * g * C_out * obytes
    interm = tmg * g * C_hid * (4 + cbytes) + tmg * g * C_out * 4
    wts = (g * C_in * g * C_hid + g * C_hid * g * C_out) * cbytes * 2 \
        + (g * C_hid + g * C_out) * 4 * 2
    footprint = 2 * blk_in + 2 * blk_out + interm + wts
    vmem_limit = int(min(max(footprint * 5 // 4 + (4 << 20), 16 << 20), 48 << 20))

    # NOTE: the constant weight/bias blocks could be single-buffered via
    # pipeline_mode=pl.Buffered(1) if channel counts grow; at <=256 KiB it is
    # not worth it.
    outg = pl.pallas_call(
        mlp_kernel,
        out_shape=jax.ShapeDtypeStruct((Mg, g * C_out), out_dtype),
        grid_spec=pltpu.PrefetchScalarGridSpec(
            num_scalar_prefetch=0,
            grid=grid,
            in_specs=[
                pl.BlockSpec((tmg, g * C_in), lambda i: (i, 0)),
                pl.BlockSpec((g * C_in, g * C_hid), lambda i: (0, 0)),
                pl.BlockSpec((1, g * C_hid), lambda i: (0, 0)),
                pl.BlockSpec((g * C_hid, g * C_out), lambda i: (0, 0)),
                pl.BlockSpec((1, g * C_out), lambda i: (0, 0)),
            ],
            out_specs=pl.BlockSpec((tmg, g * C_out), lambda i: (i, 0)),
        ),
        compiler_params=pltpu.CompilerParams(
            # Single "parallel" axis -> shards across v7x's 2 TensorCores.
            dimension_semantics=("parallel",),
            vmem_limit_bytes=vmem_limit,
        ),
    )(xg, w1g, b1g, w2g, b2g)

    out2d = outg.reshape(Mp, C_out)         # free reshape back to per-pixel rows
    if Mp != M:
        out2d = out2d[:M]
    return out2d.reshape(B, H, W, C_out)


def init_params(key, c_in, c_out):
    """Deterministic init matching the Conv2d(1x1) parameter shapes.

    Conv2d weight is (c_out, c_in, 1, 1); we store the transposed (c_in, c_out)
    matrix so the kernel computes x @ W (equivalent to the 1x1 conv).
    """
    c_hid = c_in // 2
    k1, k2, k3, k4 = jax.random.split(key, 4)
    bound1 = 1.0 / jnp.sqrt(c_in)
    bound2 = 1.0 / jnp.sqrt(c_hid)
    w1 = jax.random.uniform(k1, (c_in, c_hid), jnp.float32, -bound1, bound1)
    b1 = jax.random.uniform(k2, (1, c_hid), jnp.float32, -bound1, bound1)
    w2 = jax.random.uniform(k3, (c_hid, c_out), jnp.float32, -bound2, bound2)
    b2 = jax.random.uniform(k4, (1, c_out), jnp.float32, -bound2, bound2)
    return w1, b1, w2, b2


if __name__ == "__main__":
    key = jax.random.PRNGKey(0)
    B, H, W, C_in, C_out = 2, 16, 16, 4, 4

    kx, kp = jax.random.split(key)
    x = jax.random.normal(kx, (B, H, W, C_in), jnp.float32)
    w1, b1, w2, b2 = init_params(kp, C_in, C_out)

    # Pure-JAX reference of the same math (f32).
    ref = jnp.tanh(jnp.einsum("bhwc,cd->bhwd", x, w1) + b1[0])
    ref = jnp.einsum("bhwd,de->bhwe", ref, w2) + b2[0]

    # Strict-parity path (f32 streaming).
    fwd_f32 = jax.jit(functools.partial(mlp_forward, compute_dtype=jnp.float32))
    out_f32 = jax.block_until_ready(fwd_f32(x, w1, b1, w2, b2))
    assert out_f32.shape == (B, H, W, C_out)
    assert jnp.allclose(out_f32, ref, atol=1e-5, rtol=1e-5), float(
        jnp.max(jnp.abs(out_f32 - ref)))

    # Fast path (bf16 streaming, default): looser tolerance vs the f32 ref.
    fwd_bf16 = jax.jit(mlp_forward)
    out_bf16 = jax.block_until_ready(fwd_bf16(x, w1, b1, w2, b2))
    assert out_bf16.shape == (B, H, W, C_out)
    assert jnp.allclose(out_bf16, ref, atol=5e-2, rtol=5e-2), float(
        jnp.max(jnp.abs(out_bf16 - ref)))

    print("KERNEL_OK")
</pallas_src>

<mosaic_0001>
module attributes {stable_mosaic.version = 11 : i64} {
  func.func @mlp_kernel(%arg0: i32, %arg1: memref<8x128xf32, #tpu.memory_space<vmem>>, %arg2: memref<128x64xf32, #tpu.memory_space<vmem>>, %arg3: memref<1x64xf32, #tpu.memory_space<vmem>>, %arg4: memref<64x128xf32, #tpu.memory_space<vmem>>, %arg5: memref<1x128xf32, #tpu.memory_space<vmem>>, %arg6: memref<8x128xf32, #tpu.memory_space<vmem>>) attributes {dimension_semantics = [#tpu.dimension_semantics<parallel>], iteration_bounds = array<i64: 2>, scalar_prefetch = 0 : i64, scratch_operands = 0 : i64, tpu.core_type = #tpu.core_type<tc>, window_params = [{transform_indices = @transform_0, window_bounds = array<i64: 8, 128>}, {pipeline_mode = #tpu.pipeline_mode<synchronous>, transform_indices = @transform_1, window_bounds = array<i64: 128, 64>}, {pipeline_mode = #tpu.pipeline_mode<synchronous>, transform_indices = @transform_2, window_bounds = array<i64: 1, 64>}, {pipeline_mode = #tpu.pipeline_mode<synchronous>, transform_indices = @transform_3, window_bounds = array<i64: 64, 128>}, {pipeline_mode = #tpu.pipeline_mode<synchronous>, transform_indices = @transform_4, window_bounds = array<i64: 1, 128>}, {transform_indices = @transform_5, window_bounds = array<i64: 8, 128>}]} {
    %c0 = arith.constant 0 : index
    %c0_0 = arith.constant 0 : index
    %0 = vector.load %arg1[%c0, %c0_0] : memref<8x128xf32, #tpu.memory_space<vmem>>, vector<8x128xf32>
    %c0_1 = arith.constant 0 : index
    %c0_2 = arith.constant 0 : index
    %1 = vector.load %arg2[%c0_1, %c0_2] : memref<128x64xf32, #tpu.memory_space<vmem>>, vector<128x64xf32>
    %cst = arith.constant dense<0.000000e+00> : vector<8x64xf32>
    %2 = tpu.matmul %0, %1, %cst {dimension_numbers = #tpu.dot_dimension_numbers<[1], [0], [0], [1], [0, 0, 1, 1], [], []>} : vector<8x128xf32>, vector<128x64xf32>, vector<8x64xf32> -> vector<8x64xf32>
    %c0_3 = arith.constant 0 : index
    %c0_4 = arith.constant 0 : index
    %3 = vector.load %arg3[%c0_3, %c0_4] : memref<1x64xf32, #tpu.memory_space<vmem>>, vector<1x64xf32>
    %4 = vector.broadcast %3 : vector<1x64xf32> to vector<8x64xf32>
    %5 = arith.addf %2, %4 : vector<8x64xf32>
    %6 = math.tanh %5 : vector<8x64xf32>
    %c0_5 = arith.constant 0 : index
    %c0_6 = arith.constant 0 : index
    %7 = vector.load %arg4[%c0_5, %c0_6] : memref<64x128xf32, #tpu.memory_space<vmem>>, vector<64x128xf32>
    %cst_7 = arith.constant dense<0.000000e+00> : vector<8x128xf32>
    %8 = tpu.matmul %6, %7, %cst_7 {dimension_numbers = #tpu.dot_dimension_numbers<[1], [0], [0], [1], [0, 0, 1, 1], [], []>} : vector<8x64xf32>, vector<64x128xf32>, vector<8x128xf32> -> vector<8x128xf32>
    %c0_8 = arith.constant 0 : index
    %c0_9 = arith.constant 0 : index
    %9 = vector.load %arg5[%c0_8, %c0_9] : memref<1x128xf32, #tpu.memory_space<vmem>>, vector<1x128xf32>
    %10 = vector.broadcast %9 : vector<1x128xf32> to vector<8x128xf32>
    %11 = arith.addf %8, %10 : vector<8x128xf32>
    %c0_10 = arith.constant 0 : index
    %c0_11 = arith.constant 0 : index
    %12 = vector.load %arg6[%c0_10, %c0_11] : memref<8x128xf32, #tpu.memory_space<vmem>>, vector<8x128xf32>
    tpu.vector_store %arg6[%c0_10, %c0_11], %11 {strides = array<i32>} : memref<8x128xf32, #tpu.memory_space<vmem>>, vector<8x128xf32>,
    return
  }
  func.func @transform_0(%arg0: i32) -> (i32, i32) {
    %c0_i32 = arith.constant 0 : i32
    %c0_i32_0 = arith.constant 0 : i32
    return %arg0, %c0_i32 : i32, i32
  }
  func.func @transform_1(%arg0: i32) -> (i32, i32) {
    %c0_i32 = arith.constant 0 : i32
    %c0_i32_0 = arith.constant 0 : i32
    %c0_i32_1 = arith.constant 0 : i32
    return %c0_i32, %c0_i32_0 : i32, i32
  }
  func.func @transform_2(%arg0: i32) -> (i32, i32) {
    %c0_i32 = arith.constant 0 : i32
    %c0_i32_0 = arith.constant 0 : i32
    %c0_i32_1 = arith.constant 0 : i32
    return %c0_i32, %c0_i32_0 : i32, i32
  }
  func.func @transform_3(%arg0: i32) -> (i32, i32) {
    %c0_i32 = arith.constant 0 : i32
    %c0_i32_0 = arith.constant 0 : i32
    %c0_i32_1 = arith.constant 0 : i32
    return %c0_i32, %c0_i32_0 : i32, i32
  }
  func.func @transform_4(%arg0: i32) -> (i32, i32) {
    %c0_i32 = arith.constant 0 : i32
    %c0_i32_0 = arith.constant 0 : i32
    %c0_i32_1 = arith.constant 0 : i32
    return %c0_i32, %c0_i32_0 : i32, i32
  }
  func.func @transform_5(%arg0: i32) -> (i32, i32) {
    %c0_i32 = arith.constant 0 : i32
    %c0_i32_0 = arith.constant 0 : i32
    return %arg0, %c0_i32 : i32, i32
  }
}

</mosaic_0001>

<llo_original>
// kernel: mlp_forward.1
$region0: #{mlp_forward.1}
  #allocation0 [shape = 'u32[]', space=smem, size = 0x4, offset = 0x4, fixed_abs, tag = 'smem constant byte address 0x4 - core index']
  #allocation1 [shape = 'u32[144,128]{1,0:T(1,128)}', space=vmem, size = 0x12000, scoped, tag = 'internal scratch']
  %s0 = inlined_call_operand.vmem [shape: f32[16,128], index: 0, kind: input, shape index: {}]
  %s1 = inlined_call_operand.vmem [shape: f32[128,64], index: 1, kind: input, shape index: {}]
  %s2 = inlined_call_operand.vmem [shape: f32[1,64], index: 2, kind: input, shape index: {}]
  %s3 = inlined_call_operand.vmem [shape: f32[64,128], index: 3, kind: input, shape index: {}]
  %s4 = inlined_call_operand.vmem [shape: f32[1,128], index: 4, kind: input, shape index: {}]
  %s5 = inlined_call_operand.vmem [shape: f32[16,128], index: 5, kind: output, shape index: {}]
  %s6 = sld [smem:[#allocation0]]
  $region53: #{mlp_forward.1} parent=0
    _
  %s8 = ssub.s32 1, %s6
  %s9 = scalar_select 0, %s8, %s6
  loop: start=0, step=1, limit=4
  $region2: #{mlp_forward.1} parent=0 // loop_pre_header
    _
  $region3: #{mlp_forward.1} parent=0 // loop_header
    %s11 = sphi 0, %s15
    %p12 = scmp.ge.s32.totalorder %s11, 4
    %s21 = sphi 0, %s23
    %s24 = sphi 0, %s21
    %s25 = sphi 0, %s24
    %s41 = sphi 0, %s25
    %s45 = sphi 0, %s45
    %s47 = sphi 0, %s45
    %s48 = sphi 0, %s47
    %s62 = sphi 0, %s48
    %s66 = sphi 0, %s66
    %s68 = sphi 0, %s66
    %s69 = sphi 0, %s68
    %s83 = sphi 0, %s69
    %s87 = sphi 0, %s87
    %s89 = sphi 0, %s87
    %s90 = sphi 0, %s89
    %s104 = sphi 0, %s90
    %s108 = sphi 0, %s108
    %s110 = sphi 0, %s108
    %s111 = sphi 0, %s110
    %s125 = sphi 0, %s111
    %s131 = sphi 0, %s133
    %s134 = sphi 0, %s131
    %s135 = sphi 0, %s134
    %s151 = sphi 0, %s135
  $region4: #{mlp_forward.1} parent=0 // loop_header_branch
    %14 = sbr.rel (%p12) target = $region8
  $region5: #{mlp_forward.1} parent=0 // loop_body
    %s16 = ssub.s32 %s11, 1
    %s17 = ssub.s32 %s11, 2
    %s18 = sadd.s32 %s11, 1
    %s19 = ssub.s32 %s11, %s18
    %p20 = scmp.eq.s32.totalorder %s19, 0
    %s22 = sadd.s32 %s21, 1
    %s23 = scalar_select %p20, %s21, %s22
    %p26 = pneg %p20
    %p27 = scmp.eq.s32.totalorder %s11, 1
    %p28 = por %p26, %p27
    %p29 = scmp.ne.s32.totalorder %s21, %s24
    %p30 = scmp.eq.s32.totalorder %s11, 0
    %p31 = por %p29, %p30
    %p32 = scmp.ne.s32.totalorder %s21, %s24
    %p33 = scmp.eq.s32.totalorder %s16, 1
    %p34 = por %p32, %p33
    %p35 = scmp.ne.s32.totalorder %s24, %s25
    %p36 = scmp.eq.s32.totalorder %s16, 0
    %p37 = por %p35, %p36
    %p38 = scmp.ne.s32.totalorder %s24, %s25
    %p39 = scmp.eq.s32.totalorder %s17, 1
    %p40 = por %p38, %p39
    %p42 = scmp.ne.s32.totalorder %s25, %s41
    %p43 = scmp.eq.s32.totalorder %s17, 0
    %p44 = por %p42, %p43
    %s46 = sadd.s32 %s45, 1
    %p49 = scmp.eq.s32.totalorder %s11, 1
    %p50 = scmp.ne.s32.totalorder %s45, %s47
    %p51 = scmp.eq.s32.totalorder %s11, 0
    %p52 = por %p50, %p51
    %p53 = scmp.ne.s32.totalorder %s45, %s47
    %p54 = scmp.eq.s32.totalorder %s16, 1
    %p55 = por %p53, %p54
    %p56 = scmp.ne.s32.totalorder %s47, %s48
    %p57 = scmp.eq.s32.totalorder %s16, 0
    %p58 = por %p56, %p57
    %p59 = scmp.ne.s32.totalorder %s47, %s48
    %p60 = scmp.eq.s32.totalorder %s17, 1
    %p61 = por %p59, %p60
    %p63 = scmp.ne.s32.totalorder %s48, %s62
    %p64 = scmp.eq.s32.totalorder %s17, 0
    %p65 = por %p63, %p64
    %s67 = sadd.s32 %s66, 1
    %p70 = scmp.eq.s32.totalorder %s11, 1
    %p71 = scmp.ne.s32.totalorder %s66, %s68
    %p72 = scmp.eq.s32.totalorder %s11, 0
    %p73 = por %p71, %p72
    %p74 = scmp.ne.s32.totalorder %s66, %s68
    %p75 = scmp.eq.s32.totalorder %s16, 1
    %p76 = por %p74, %p75
    %p77 = scmp.ne.s32.totalorder %s68, %s69
    %p78 = scmp.eq.s32.totalorder %s16, 0
    %p79 = por %p77, %p78
    %p80 = scmp.ne.s32.totalorder %s68, %s69
    %p81 = scmp.eq.s32.totalorder %s17, 1
    %p82 = por %p80, %p81
    %p84 = scmp.ne.s32.totalorder %s69, %s83
    %p85 = scmp.eq.s32.totalorder %s17, 0
    %p86 = por %p84, %p85
    %s88 = sadd.s32 %s87, 1
    %p91 = scmp.eq.s32.totalorder %s11, 1
    %p92 = scmp.ne.s32.totalorder %s87, %s89
    %p93 = scmp.eq.s32.totalorder %s11, 0
    %p94 = por %p92, %p93
    %p95 = scmp.ne.s32.totalorder %s87, %s89
    %p96 = scmp.eq.s32.totalorder %s16, 1
    %p97 = por %p95, %p96
    %p98 = scmp.ne.s32.totalorder %s89, %s90
    %p99 = scmp.eq.s32.totalorder %s16, 0
    %p100 = por %p98, %p99
    %p101 = scmp.ne.s32.totalorder %s89, %s90
    %p102 = scmp.eq.s32.totalorder %s17, 1
    %p103 = por %p101, %p102
    %p105 = scmp.ne.s32.totalorder %s90, %s104
    %p106 = scmp.eq.s32.totalorder %s17, 0
    %p107 = por %p105, %p106
    %s109 = sadd.s32 %s108, 1
    %p112 = scmp.eq.s32.totalorder %s11, 1
    %p113 = scmp.ne.s32.totalorder %s108, %s110
    %p114 = scmp.eq.s32.totalorder %s11, 0
    %p115 = por %p113, %p114
    %p116 = scmp.ne.s32.totalorder %s108, %s110
    %p117 = scmp.eq.s32.totalorder %s16, 1
    %p118 = por %p116, %p117
    %p119 = scmp.ne.s32.totalorder %s110, %s111
    %p120 = scmp.eq.s32.totalorder %s16, 0
    %p121 = por %p119, %p120
    %p122 = scmp.ne.s32.totalorder %s110, %s111
    %p123 = scmp.eq.s32.totalorder %s17, 1
    %p124 = por %p122, %p123
    %p126 = scmp.ne.s32.totalorder %s111, %s125
    %p127 = scmp.eq.s32.totalorder %s17, 0
    %p128 = por %p126, %p127
    %s129 = ssub.s32 %s11, %s18
    %p130 = scmp.eq.s32.totalorder %s129, 0
    %s132 = sadd.s32 %s131, 1
    %s133 = scalar_select %p130, %s131, %s132
    %p136 = pneg %p130
    %p137 = scmp.eq.s32.totalorder %s11, 1
    %p138 = por %p136, %p137
    %p139 = scmp.ne.s32.totalorder %s131, %s134
    %p140 = scmp.eq.s32.totalorder %s11, 0
    %p141 = por %p139, %p140
    %p142 = scmp.ne.s32.totalorder %s131, %s134
    %p143 = scmp.eq.s32.totalorder %s16, 1
    %p144 = por %p142, %p143
    %p145 = scmp.ne.s32.totalorder %s134, %s135
    %p146 = scmp.eq.s32.totalorder %s16, 0
    %p147 = por %p145, %p146
    %p148 = scmp.ne.s32.totalorder %s134, %s135
    %p149 = scmp.eq.s32.totalorder %s17, 1
    %p150 = por %p148, %p149
    %p152 = scmp.ne.s32.totalorder %s135, %s151
    %p153 = scmp.eq.s32.totalorder %s17, 0
    %p154 = por %p152, %p153
    %p155 = scmp.le.s32.totalorder 1, %s11
    %p156 = scmp.lt.s32.totalorder %s11, 3
    %p157 = pnand %p155, %p156
    %p158 = pneg %p157
    // Predicated region
    $region9: #{mlp_forward.1} parent=5 // pred_check
      _
    $region10: #{mlp_forward.1} parent=5 // pred_check_branch
      %160 = sbr.rel (%p157) target = $region12
    $region11: #{mlp_forward.1} parent=5 // pred_region
      %s161 = ssub.s32 %s11, 1
      // Predicated region
      $region13: #{mlp_forward.1} parent=11 // pred_check
        %p162 = pneg %p58
      $region14: #{mlp_forward.1} parent=11 // pred_check_branch
        %164 = sbr.rel (%p162) target = $region16
      $region15: #{mlp_forward.1} parent=11 // pred_region
        _
      $region16: #{mlp_forward.1} parent=11 // pred_fallthru
        _
      // Predicated region
      $region17: #{mlp_forward.1} parent=11 // pred_check
        %p165 = pneg %p79
      $region18: #{mlp_forward.1} parent=11 // pred_check_branch
        %167 = sbr.rel (%p165) target = $region20
      $region19: #{mlp_forward.1} parent=11 // pred_region
        _
      $region20: #{mlp_forward.1} parent=11 // pred_fallthru
        _
      // Predicated region
      $region21: #{mlp_forward.1} parent=11 // pred_check
        %p168 = pneg %p100
      $region22: #{mlp_forward.1} parent=11 // pred_check_branch
        %170 = sbr.rel (%p168) target = $region24
      $region23: #{mlp_forward.1} parent=11 // pred_region
        _
      $region24: #{mlp_forward.1} parent=11 // pred_fallthru
        _
      // Predicated region
      $region25: #{mlp_forward.1} parent=11 // pred_check
        %p171 = pneg %p121
      $region26: #{mlp_forward.1} parent=11 // pred_check_branch
        %173 = sbr.rel (%p171) target = $region28
      $region27: #{mlp_forward.1} parent=11 // pred_region
        _
      $region28: #{mlp_forward.1} parent=11 // pred_fallthru
        _
    $region12: #{mlp_forward.1} parent=5 // pred_fallthru
      _
    %p174 = scmp.lt.s32.totalorder %s11, 2
    // Predicated region
    $region29: #{mlp_forward.1} parent=5 // pred_check
      %p175 = pneg %p174
    $region30: #{mlp_forward.1} parent=5 // pred_check_branch
      %177 = sbr.rel (%p175) target = $region32
    $region31: #{mlp_forward.1} parent=5 // pred_region
      // Predicated region
      $region33: #{mlp_forward.1} parent=31 // pred_check
        %p178 = pneg %p31
      $region34: #{mlp_forward.1} parent=31 // pred_check_branch
        %180 = sbr.rel (%p178) target = $region36
      $region35: #{mlp_forward.1} parent=31 // pred_region
        %p181 = scmp.lt.s32.totalorder %s11, 1
        %s182 = scalar_select %p181, %s11, 1
        %s183 = smul.addr %s182, 8
        %s184 = scalar_lea.vmem %s0, %s183
      $region36: #{mlp_forward.1} parent=31 // pred_fallthru
        _
    $region32: #{mlp_forward.1} parent=5 // pred_fallthru
      _
    %p185 = scmp.le.s32.totalorder 1, %s11
    %p186 = scmp.lt.s32.totalorder %s11, 3
    %p187 = pnand %p185, %p186
    %p188 = pneg %p187
    // Predicated region
    $region37: #{mlp_forward.1} parent=5 // pred_check
      _
    $region38: #{mlp_forward.1} parent=5 // pred_check_branch
      %190 = sbr.rel (%p187) target = $region40
    $region39: #{mlp_forward.1} parent=5 // pred_region
      %s191 = ssub.s32 %s11, 1
      %p192 = scmp.lt.s32.totalorder %s16, 1
      %s193 = scalar_select %p192, %s16, 1
      %s194 = smul.addr %s193, 8
      %s195 = scalar_lea.vmem %s0, %s194
      %p196 = pneg %p37
      %p197 = pneg %p34
      %p198 = pneg %p58
      %p199 = pneg %p55
      %p200 = pneg %p79
      %p201 = pneg %p76
      %p202 = pneg %p100
      %p203 = pneg %p97
      %p204 = pneg %p121
      %p205 = pneg %p118
      %p206 = pneg %p147
      %p207 = pneg %p144
      %p208 = scmp.lt.s32.totalorder %s16, 1
      %s209 = scalar_select %p208, %s16, 1
      %s210 = smul.addr %s209, 8
      %s211 = scalar_lea.vmem %s5, %s210
      %p212 = scmp.lt.s32.totalorder %s16, 1
      %s213 = scalar_select %p212, %s16, 1
      %s214 = smul.addr %s213, 8
      %s215 = scalar_lea.vmem %s0, %s214
      %p216 = scmp.lt.s32.totalorder %s16, 1
      %s217 = scalar_select %p216, %s16, 1
      %s218 = smul.addr %s217, 8
      %s219 = scalar_lea.vmem %s5, %s218
      %v220 = vld [vmem:[%s215] sm:$0xff]
      %v221 = vld [vmem:[%s1] sm:$0xff]
      %v222 = vld [vmem:[%s1 + $0x8] sm:$0xff]
      %v223 = vld [vmem:[%s1 + $0x10] sm:$0xff]
      %v224 = vld [vmem:[%s1 + $0x18] sm:$0xff]
      %v225 = vld [vmem:[%s1 + $0x20] sm:$0xff]
      %v226 = vld [vmem:[%s1 + $0x28] sm:$0xff]
      %v227 = vld [vmem:[%s1 + $0x30] sm:$0xff]
      %v228 = vld [vmem:[%s1 + $0x38] sm:$0xff]
      %v229 = vld [vmem:[%s1 + $0x40] sm:$0xff]
      %v230 = vld [vmem:[%s1 + $0x48] sm:$0xff]
      %v231 = vld [vmem:[%s1 + $0x50] sm:$0xff]
      %v232 = vld [vmem:[%s1 + $0x58] sm:$0xff]
      %v233 = vld [vmem:[%s1 + $0x60] sm:$0xff]
      %v234 = vld [vmem:[%s1 + $0x68] sm:$0xff]
      %v235 = vld [vmem:[%s1 + $0x70] sm:$0xff]
      %v236 = vld [vmem:[%s1 + $0x78] sm:$0xff]
      %v237 = vld [vmem:[%s2] sm:$0x1]
      %v239 = vlaneseq
      %v240 = vshrl.u32 %v239, 7
      %v241 = vsub.s32 0, %v240
      %v242 = vrot.slane %v237, %v241
      %244 = vmatprep.subr.mxu0 0.0
      %245 = vmatpush1.msra.mxu0 %v221
      %246 = vmatprep.subr.mxu0 0.0
      %247 = vmatpush1.msra.mxu0 %v222
      %248 = vmatprep.subr.mxu0 0.0
      %249 = vmatpush1.msra.mxu0 %v223
      %250 = vmatprep.subr.mxu0 0.0
      %251 = vmatpush1.msra.mxu0 %v224
      %252 = vmatprep.subr.mxu0 0.0
      %253 = vmatpush1.msra.mxu0 %v225
      %254 = vmatprep.subr.mxu0 0.0
      %255 = vmatpush1.msra.mxu0 %v226
      %256 = vmatprep.subr.mxu0 0.0
      %257 = vmatpush1.msra.mxu0 %v227
      %258 = vmatprep.subr.mxu0 0.0
      %259 = vmatpush1.msra.mxu0 %v228
      %260 = vmatprep.subr.mxu0 0.0
      %261 = vmatpush1.msra.mxu0 %v229
      %262 = vmatprep.subr.mxu0 0.0
      %263 = vmatpush1.msra.mxu0 %v230
      %264 = vmatprep.subr.mxu0 0.0
      %265 = vmatpush1.msra.mxu0 %v231
      %266 = vmatprep.subr.mxu0 0.0
      %267 = vmatpush1.msra.mxu0 %v232
      %268 = vmatprep.subr.mxu0 0.0
      %269 = vmatpush1.msra.mxu0 %v233
      %270 = vmatprep.subr.mxu0 0.0
      %271 = vmatpush1.msra.mxu0 %v234
      %272 = vmatprep.subr.mxu0 0.0
      %273 = vmatpush1.msra.mxu0 %v235
      %274 = vmatprep.subr.mxu0 0.0
      %275 = vmatpush1.msra.mxu0 %v236
      %276 = vmatprep.subr.mxu0 0.0
      %277 = vmatpush1.msra.mxu0 0.0
      %278 = vmatprep.subr.mxu0 0.0
      %279 = vmatpush1.msra.mxu0 0.0
      %280 = vmatprep.subr.mxu0 0.0
      %281 = vmatpush1.msra.mxu0 0.0
      %282 = vmatprep.subr.mxu0 0.0
      %283 = vmatpush1.msra.mxu0 0.0
      %284 = vmatprep.subr.mxu0 0.0
      %285 = vmatpush1.msra.mxu0 0.0
      %286 = vmatprep.subr.mxu0 0.0
      %287 = vmatpush1.msra.mxu0 0.0
      %288 = vmatprep.subr.mxu0 0.0
      %289 = vmatpush1.msra.mxu0 0.0
      %290 = vmatprep.subr.mxu0 0.0
      %291 = vmatpush1.msra.mxu0 0.0
      %292 = vmatprep.subr.mxu0 0.0
      %293 = vmatpush1.msra.mxu0 0.0
      %294 = vmatprep.subr.mxu0 0.0
      %295 = vmatpush1.msra.mxu0 0.0
      %296 = vmatprep.subr.mxu0 0.0
      %297 = vmatpush1.msra.mxu0 0.0
      %298 = vmatprep.subr.mxu0 0.0
      %299 = vmatpush1.msra.mxu0 0.0
      %300 = vmatprep.subr.mxu0 0.0
      %301 = vmatpush1.msra.mxu0 0.0
      %302 = vmatprep.subr.mxu0 0.0
      %303 = vmatpush1.msra.mxu0 0.0
      %304 = vmatprep.subr.mxu0 0.0
      %305 = vmatpush1.msra.mxu0 0.0
      %306 = vmatprep.subr.mxu0 0.0
      %307 = vmatpush1.msra.mxu0 0.0
      %308 = vmatprep.mubr.f32.mxu0 0.0
      %309 = vmatmul.mubr.f32.gmra.mrb[0].mxu0 %v220
      %v310 = vpop.f32.mrb[0].mxu0
      %v311 = vadd.f32 %v242, %v310
      %v312 = vpop.f32.mrb[0].mxu0
      %313 = vdwg.mxu0
      %v314 = vtanh.pop %v311
      %v315 = vld [vmem:[%s3] sm:$0xff]
      %v316 = vld [vmem:[%s3 + $0x8] sm:$0xff]
      %v317 = vld [vmem:[%s3 + $0x10] sm:$0xff]
      %v318 = vld [vmem:[%s3 + $0x18] sm:$0xff]
      %v319 = vld [vmem:[%s3 + $0x20] sm:$0xff]
      %v320 = vld [vmem:[%s3 + $0x28] sm:$0xff]
      %v321 = vld [vmem:[%s3 + $0x30] sm:$0xff]
      %v322 = vld [vmem:[%s3 + $0x38] sm:$0xff]
      %v323 = vld [vmem:[%s4] sm:$0x1]
      %v325 = vlaneseq
      %v326 = vshrl.u32 %v325, 7
      %v327 = vsub.s32 0, %v326
      %v328 = vrot.slane %v323, %v327
      %vm330 = vcmask 523264
      %v332 = vsel %vm330, %v314, 0
      %334 = vmatprep.subr.mxu0 0.0
      %335 = vmatpush1.msra.mxu0 %v315
      %336 = vmatprep.subr.mxu0 0.0
      %337 = vmatpush1.msra.mxu0 %v316
      %338 = vmatprep.subr.mxu0 0.0
      %339 = vmatpush1.msra.mxu0 %v317
      %340 = vmatprep.subr.mxu0 0.0
      %341 = vmatpush1.msra.mxu0 %v318
      %342 = vmatprep.subr.mxu0 0.0
      %343 = vmatpush1.msra.mxu0 %v319
      %344 = vmatprep.subr.mxu0 0.0
      %345 = vmatpush1.msra.mxu0 %v320
      %346 = vmatprep.subr.mxu0 0.0
      %347 = vmatpush1.msra.mxu0 %v321
      %348 = vmatprep.subr.mxu0 0.0
      %349 = vmatpush1.msra.mxu0 %v322
      %350 = vmatprep.subr.mxu0 0.0
      %351 = vmatpush1.msra.mxu0 0.0
      %352 = vmatprep.subr.mxu0 0.0
      %353 = vmatpush1.msra.mxu0 0.0
      %354 = vmatprep.subr.mxu0 0.0
      %355 = vmatpush1.msra.mxu0 0.0
      %356 = vmatprep.subr.mxu0 0.0
      %357 = vmatpush1.msra.mxu0 0.0
      %358 = vmatprep.subr.mxu0 0.0
      %359 = vmatpush1.msra.mxu0 0.0
      %360 = vmatprep.subr.mxu0 0.0
      %361 = vmatpush1.msra.mxu0 0.0
      %362 = vmatprep.subr.mxu0 0.0
      %363 = vmatpush1.msra.mxu0 0.0
      %364 = vmatprep.subr.mxu0 0.0
      %365 = vmatpush1.msra.mxu0 0.0
      %366 = vmatprep.subr.mxu0 0.0
      %367 = vmatpush1.msra.mxu0 0.0
      %368 = vmatprep.subr.mxu0 0.0
      %369 = vmatpush1.msra.mxu0 0.0
      %370 = vmatprep.subr.mxu0 0.0
      %371 = vmatpush1.msra.mxu0 0.0
      %372 = vmatprep.subr.mxu0 0.0
      %373 = vmatpush1.msra.mxu0 0.0
      %374 = vmatprep.subr.mxu0 0.0
      %375 = vmatpush1.msra.mxu0 0.0
      %376 = vmatprep.subr.mxu0 0.0
      %377 = vmatpush1.msra.mxu0 0.0
      %378 = vmatprep.subr.mxu0 0.0
      %379 = vmatpush1.msra.mxu0 0.0
      %380 = vmatprep.subr.mxu0 0.0
      %381 = vmatpush1.msra.mxu0 0.0
      %382 = vmatprep.subr.mxu0 0.0
      %383 = vmatpush1.msra.mxu0 0.0
      %384 = vmatprep.subr.mxu0 0.0
      %385 = vmatpush1.msra.mxu0 0.0
      %386 = vmatprep.subr.mxu0 0.0
      %387 = vmatpush1.msra.mxu0 0.0
      %388 = vmatprep.subr.mxu0 0.0
      %389 = vmatpush1.msra.mxu0 0.0
      %390 = vmatprep.subr.mxu0 0.0
      %391 = vmatpush1.msra.mxu0 0.0
      %392 = vmatprep.subr.mxu0 0.0
      %393 = vmatpush1.msra.mxu0 0.0
      %394 = vmatprep.subr.mxu0 0.0
      %395 = vmatpush1.msra.mxu0 0.0
      %396 = vmatprep.subr.mxu0 0.0
      %397 = vmatpush1.msra.mxu0 0.0
      %398 = vmatprep.mubr.f32.mxu0 0.0
      %399 = vmatmul.mubr.f32.gmra.mrb[0].mxu0 %v332
      %v400 = vpop.f32.mrb[0].mxu0
      %v401 = vadd.f32 %v328, %v400
      %v402 = vpop.f32.mrb[0].mxu0
      %403 = vdwg.mxu0
      %404 = vst [vmem:[%s219] sm:$0xff] %v401
      %p405 = scmp.lt.s32.totalorder %s16, 1
      %s406 = scalar_select %p405, %s16, 1
      %s407 = smul.addr %s406, 8
      %s408 = scalar_lea.vmem %s5, %s407
      // Predicated region
      $region41: #{mlp_forward.1} parent=39 // pred_check
        %p409 = pneg %p144
      $region42: #{mlp_forward.1} parent=39 // pred_check_branch
        %411 = sbr.rel (%p409) target = $region44
      $region43: #{mlp_forward.1} parent=39 // pred_region
        _
      $region44: #{mlp_forward.1} parent=39 // pred_fallthru
        _
    $region40: #{mlp_forward.1} parent=5 // pred_fallthru
      _
    %p412 = scmp.le.s32.totalorder 2, %s11
    // Predicated region
    $region45: #{mlp_forward.1} parent=5 // pred_check
      %p413 = pneg %p412
    $region46: #{mlp_forward.1} parent=5 // pred_check_branch
      %415 = sbr.rel (%p413) target = $region48
    $region47: #{mlp_forward.1} parent=5 // pred_region
      %s416 = ssub.s32 %s11, 2
      // Predicated region
      $region49: #{mlp_forward.1} parent=47 // pred_check
        %p417 = pneg %p150
      $region50: #{mlp_forward.1} parent=47 // pred_check_branch
        %419 = sbr.rel (%p417) target = $region52
      $region51: #{mlp_forward.1} parent=47 // pred_region
        %p420 = scmp.lt.s32.totalorder %s17, 1
        %s421 = scalar_select %p420, %s17, 1
        %s422 = smul.addr %s421, 8
        %s423 = scalar_lea.vmem %s5, %s422
      $region52: #{mlp_forward.1} parent=47 // pred_fallthru
        _
    $region48: #{mlp_forward.1} parent=5 // pred_fallthru
      _
  $region6: #{mlp_forward.1} parent=0 // loop_footer
    %s15 = sadd.s32 1, %s11
  $region7: #{mlp_forward.1} parent=0 // loop_footer_branch
    %10 = sbr.rel target = $region3
  $region8: #{mlp_forward.1} parent=0 // loop_exit
    _

</llo_original>
